<compile_context>
chip_gen: v6e
topology: v6e:2x2x1
jax: 0.10.0
libtpu: 0.0.40
codegen_flags: <defaults>
</compile_context>

<pallas_src>
import jax
import jax.numpy as jnp
from jax.experimental import pallas as pl
from jax.experimental.pallas import tpu as pltpu

IN_DIM = 120    # logical fc1 in_features (PyTorch)
IN_PAD = 128    # zero-padded feature axis (one full vreg lane row)
HID_DIM = 84
OUT_DIM = 10


def _mlp_head_kernel(x_ref, w1_ref, b1_ref, w2_ref, b2_ref, o_ref):
    # fc1: MXU matmul with f32 accumulation, then bias + ReLU in f32 on the VPU.
    h = jnp.dot(x_ref[...], w1_ref[...], preferred_element_type=jnp.float32)
    h = jnp.maximum(h + b1_ref[...], 0.0)          # b1 is (1, HID_DIM) -> broadcasts
    # fc2: cast hidden to the weight dtype for the second MXU pass
    # (no-op when the weights are f32).
    y = jnp.dot(h.astype(w2_ref.dtype), w2_ref[...],
                preferred_element_type=jnp.float32)
    o_ref[...] = (y + b2_ref[...]).astype(o_ref.dtype)


def pad_inputs(x, w1):
    """Zero-pad the feature axis 120 -> 128.  Ideally done once, caller side,
    so the padded layout is what lives in HBM."""
    if x.shape[-1] == IN_DIM:
        x = jnp.pad(x, ((0, 0), (0, IN_PAD - IN_DIM)))
    if w1.shape[0] == IN_DIM:
        w1 = jnp.pad(w1, ((0, IN_PAD - IN_DIM), (0, 0)))
    return x, w1


def _pick_tile(batch, tile_batch, x_itemsize):
    """Batch-tile size: big enough to amortize per-step overhead, small enough
    to fit the 32 MiB scoped-VMEM budget and to give >=2 grid steps on v7x."""
    # Per-row VMEM working set: 2 x-buffers + 2 out-buffers (pipeline) plus the
    # f32 hidden and its cast copy inside the body.
    per_row = (2 * IN_PAD * x_itemsize + 2 * OUT_DIM * 4
               + HID_DIM * 4 + HID_DIM * x_itemsize)
    budget = 24 * 1024 * 1024                     # headroom under 32 MiB scoped limit
    max_tb = max(512, (budget // per_row) // 512 * 512)

    tb = min(tile_batch, batch, max_tb)
    if batch >= 2 * 512 and tb > batch // 2:
        # Keep >=2 grid steps so the "parallel" axis can use both v7x TCs.
        tb = batch // 2
    if tb < batch:
        tb = (tb // 512) * 512 if tb >= 512 else max(16, (tb // 16) * 16)
    return max(tb, 1)


def sequential_local_prediction_head_cifar(x, w1, b1, w2, b2, *, tile_batch=4096):
    """Forward pass of the CIFAR prediction head.

    x : [B, 120] (or [B, 128] pre-padded with zeros), f32 or bf16
    w1: [120, 84] (or [128, 84] pre-padded) = fc1.weight.T
    b1: [84] or [1, 84]
    w2: [84, 10] = fc2.weight.T
    b2: [10] or [1, 10]
    Returns [B, 10] float32.
    """
    b1 = b1.reshape(1, HID_DIM)
    b2 = b2.reshape(1, OUT_DIM)
    x, w1 = pad_inputs(x, w1)
    assert x.shape[-1] == IN_PAD, x.shape
    assert w1.shape == (IN_PAD, HID_DIM), w1.shape
    assert w2.shape == (HID_DIM, OUT_DIM), w2.shape

    B = x.shape[0]
    tb = _pick_tile(B, tile_batch, x.dtype.itemsize)
    grid = (pl.cdiv(B, tb),)

    const = lambda i: (0, 0)
    in_specs = [
        # Streamed activation tiles (default double-buffered pipeline).
        pl.BlockSpec((tb, IN_PAD), lambda i: (i, 0)),
        # Parameters: full-array blocks, constant index_map -> DMA'd once,
        # resident in VMEM across all batch tiles.
        pl.BlockSpec((IN_PAD, HID_DIM), const),
        pl.BlockSpec((1, HID_DIM), const),
        pl.BlockSpec((HID_DIM, OUT_DIM), const),
        pl.BlockSpec((1, OUT_DIM), const),
    ]
    out_specs = pl.BlockSpec((tb, OUT_DIM), lambda i: (i, 0))

    flops = 2 * B * (IN_PAD * HID_DIM + HID_DIM * OUT_DIM)
    bytes_accessed = (
        B * IN_PAD * x.dtype.itemsize
        + B * OUT_DIM * 4
        + IN_PAD * HID_DIM * w1.dtype.itemsize
        + HID_DIM * OUT_DIM * w2.dtype.itemsize
        + HID_DIM * 4 + OUT_DIM * 4
    )

    return pl.pallas_call(
        _mlp_head_kernel,
        out_shape=jax.ShapeDtypeStruct((B, OUT_DIM), jnp.float32),
        grid=grid,
        in_specs=in_specs,
        out_specs=out_specs,
        compiler_params=pltpu.CompilerParams(
            dimension_semantics=("parallel",),    # megacore sharding on v7x
            vmem_limit_bytes=32 * 1024 * 1024,    # portable across v5e/v6e/v7x
        ),
        cost_estimate=pl.CostEstimate(
            flops=flops, transcendentals=0, bytes_accessed=bytes_accessed),
    )(x, w1, b1, w2, b2)


def _init_params(key):
    """Deterministic init mimicking nn.Linear default (uniform +-1/sqrt(fan_in))."""
    k1, k2, k3, k4 = jax.random.split(key, 4)
    bound1 = 1.0 / jnp.sqrt(jnp.float32(IN_DIM))
    bound2 = 1.0 / jnp.sqrt(jnp.float32(HID_DIM))
    # Stored transposed relative to PyTorch's [out, in] convention.
    w1 = jax.random.uniform(k1, (IN_DIM, HID_DIM), jnp.float32, -bound1, bound1)
    b1 = jax.random.uniform(k2, (HID_DIM,), jnp.float32, -bound1, bound1)
    w2 = jax.random.uniform(k3, (HID_DIM, OUT_DIM), jnp.float32, -bound2, bound2)
    b2 = jax.random.uniform(k4, (OUT_DIM,), jnp.float32, -bound2, bound2)
    return w1, b1, w2, b2


def _reference_f32(x, w1, b1, w2, b2):
    """Pure-JAX f32 reference of the PyTorch module forward."""
    h = jnp.maximum(
        jnp.dot(x, w1, precision=jax.lax.Precision.HIGHEST) + b1, 0.0)
    return jnp.dot(h, w2, precision=jax.lax.Precision.HIGHEST) + b2


if __name__ == "__main__":
    key = jax.random.PRNGKey(0)
    k_x, k_p = jax.random.split(key)

    B = 64
    x = jax.random.normal(k_x, (B, IN_DIM), jnp.float32)
    w1, b1, w2, b2 = _init_params(k_p)

    # Small tile_batch so the demo exercises the batch grid (4 steps); the
    # default of 4096 (rounded to multiples of 512) is the production choice.
    out = sequential_local_prediction_head_cifar(x, w1, b1, w2, b2, tile_batch=16)
    out = jax.block_until_ready(out)
    assert out.shape == (B, OUT_DIM), out.shape
    assert out.dtype == jnp.float32, out.dtype

    ref = _reference_f32(x, w1, b1, w2, b2)
    assert jnp.allclose(out, ref, atol=2e-2, rtol=2e-2), "mismatch vs f32 reference"

    print("KERNEL_OK")
</pallas_src>

<mosaic_0001>
module attributes {stable_mosaic.version = 11 : i64} {
  func.func @_mlp_head_kernel(%arg0: i32, %arg1: memref<16x128xf32, #tpu.memory_space<vmem>>, %arg2: memref<128x84xf32, #tpu.memory_space<vmem>>, %arg3: memref<1x84xf32, #tpu.memory_space<vmem>>, %arg4: memref<84x10xf32, #tpu.memory_space<vmem>>, %arg5: memref<1x10xf32, #tpu.memory_space<vmem>>, %arg6: memref<16x10xf32, #tpu.memory_space<vmem>>) attributes {dimension_semantics = [#tpu.dimension_semantics<parallel>], iteration_bounds = array<i64: 4>, scalar_prefetch = 0 : i64, scratch_operands = 0 : i64, tpu.core_type = #tpu.core_type<tc>, window_params = [{transform_indices = @transform_0, window_bounds = array<i64: 16, 128>}, {pipeline_mode = #tpu.pipeline_mode<synchronous>, transform_indices = @transform_1, window_bounds = array<i64: 128, 84>}, {pipeline_mode = #tpu.pipeline_mode<synchronous>, transform_indices = @transform_2, window_bounds = array<i64: 1, 84>}, {pipeline_mode = #tpu.pipeline_mode<synchronous>, transform_indices = @transform_3, window_bounds = array<i64: 84, 10>}, {pipeline_mode = #tpu.pipeline_mode<synchronous>, transform_indices = @transform_4, window_bounds = array<i64: 1, 10>}, {transform_indices = @transform_5, window_bounds = array<i64: 16, 10>}]} {
    %c0 = arith.constant 0 : index
    %c0_0 = arith.constant 0 : index
    %0 = vector.load %arg1[%c0, %c0_0] : memref<16x128xf32, #tpu.memory_space<vmem>>, vector<16x128xf32>
    %c0_1 = arith.constant 0 : index
    %c0_2 = arith.constant 0 : index
    %1 = vector.load %arg2[%c0_1, %c0_2] : memref<128x84xf32, #tpu.memory_space<vmem>>, vector<128x84xf32>
    %cst = arith.constant dense<0.000000e+00> : vector<16x84xf32>
    %2 = tpu.matmul %0, %1, %cst {dimension_numbers = #tpu.dot_dimension_numbers<[1], [0], [0], [1], [0, 0, 1, 1], [], []>} : vector<16x128xf32>, vector<128x84xf32>, vector<16x84xf32> -> vector<16x84xf32>
    %c0_3 = arith.constant 0 : index
    %c0_4 = arith.constant 0 : index
    %3 = vector.load %arg3[%c0_3, %c0_4] : memref<1x84xf32, #tpu.memory_space<vmem>>, vector<1x84xf32>
    %4 = vector.broadcast %3 : vector<1x84xf32> to vector<16x84xf32>
    %5 = arith.addf %2, %4 : vector<16x84xf32>
    %cst_5 = arith.constant 0.000000e+00 : f32
    %6 = vector.broadcast %cst_5 : f32 to vector<16x84xf32>
    %7 = arith.maximumf %5, %6 : vector<16x84xf32>
    %c0_6 = arith.constant 0 : index
    %c0_7 = arith.constant 0 : index
    %8 = vector.load %arg4[%c0_6, %c0_7] : memref<84x10xf32, #tpu.memory_space<vmem>>, vector<84x10xf32>
    %cst_8 = arith.constant dense<0.000000e+00> : vector<16x10xf32>
    %9 = tpu.matmul %7, %8, %cst_8 {dimension_numbers = #tpu.dot_dimension_numbers<[1], [0], [0], [1], [0, 0, 1, 1], [], []>} : vector<16x84xf32>, vector<84x10xf32>, vector<16x10xf32> -> vector<16x10xf32>
    %c0_9 = arith.constant 0 : index
    %c0_10 = arith.constant 0 : index
    %10 = vector.load %arg5[%c0_9, %c0_10] : memref<1x10xf32, #tpu.memory_space<vmem>>, vector<1x10xf32>
    %11 = vector.broadcast %10 : vector<1x10xf32> to vector<16x10xf32>
    %12 = arith.addf %9, %11 : vector<16x10xf32>
    %c0_11 = arith.constant 0 : index
    %c0_12 = arith.constant 0 : index
    %13 = vector.load %arg6[%c0_11, %c0_12] : memref<16x10xf32, #tpu.memory_space<vmem>>, vector<16x10xf32>
    tpu.vector_store %arg6[%c0_11, %c0_12], %12 {strides = array<i32>} : memref<16x10xf32, #tpu.memory_space<vmem>>, vector<16x10xf32>,
    return
  }
  func.func @transform_0(%arg0: i32) -> (i32, i32) {
    %c0_i32 = arith.constant 0 : i32
    %c0_i32_0 = arith.constant 0 : i32
    return %arg0, %c0_i32 : i32, i32
  }
  func.func @transform_1(%arg0: i32) -> (i32, i32) {
    %c0_i32 = arith.constant 0 : i32
    %c0_i32_0 = arith.constant 0 : i32
    %c0_i32_1 = arith.constant 0 : i32
    return %c0_i32, %c0_i32_0 : i32, i32
  }
  func.func @transform_2(%arg0: i32) -> (i32, i32) {
    %c0_i32 = arith.constant 0 : i32
    %c0_i32_0 = arith.constant 0 : i32
    %c0_i32_1 = arith.constant 0 : i32
    return %c0_i32, %c0_i32_0 : i32, i32
  }
  func.func @transform_3(%arg0: i32) -> (i32, i32) {
    %c0_i32 = arith.constant 0 : i32
    %c0_i32_0 = arith.constant 0 : i32
    %c0_i32_1 = arith.constant 0 : i32
    return %c0_i32, %c0_i32_0 : i32, i32
  }
  func.func @transform_4(%arg0: i32) -> (i32, i32) {
    %c0_i32 = arith.constant 0 : i32
    %c0_i32_0 = arith.constant 0 : i32
    %c0_i32_1 = arith.constant 0 : i32
    return %c0_i32, %c0_i32_0 : i32, i32
  }
  func.func @transform_5(%arg0: i32) -> (i32, i32) {
    %c0_i32 = arith.constant 0 : i32
    %c0_i32_0 = arith.constant 0 : i32
    return %arg0, %c0_i32 : i32, i32
  }
}

</mosaic_0001>

<llo_original>
// kernel: tpu_custom_call.1
$region0: #{tpu_custom_call.1}
  #allocation0 [shape = 'u32[]', space=smem, size = 0x4, offset = 0x4, fixed_abs, tag = 'smem constant byte address 0x4 - core index']
  #allocation1 [shape = 'u32[144,128]{1,0:T(1,128)}', space=vmem, size = 0x12000, scoped, tag = 'internal scratch']
  %s0 = inlined_call_operand.vmem [shape: f32[64,128], index: 0, kind: input, shape index: {}]
  %s1 = inlined_call_operand.vmem [shape: f32[128,84], index: 1, kind: input, shape index: {}]
  %s2 = inlined_call_operand.vmem [shape: f32[1,84], index: 2, kind: input, shape index: {}]
  %s3 = inlined_call_operand.vmem [shape: f32[84,10], index: 3, kind: input, shape index: {}]
  %s4 = inlined_call_operand.vmem [shape: f32[1,10], index: 4, kind: input, shape index: {}]
  %s5 = inlined_call_operand.vmem [shape: f32[64,10], index: 5, kind: output, shape index: {}]
  %s6 = sld [smem:[#allocation0]]
  $region53: #{tpu_custom_call.1} parent=0
    _
  %s8 = ssub.s32 1, %s6
  %s9 = scalar_select 0, %s8, %s6
  loop: start=0, step=1, limit=6
  $region2: #{tpu_custom_call.1} parent=0 // loop_pre_header
    _
  $region3: #{tpu_custom_call.1} parent=0 // loop_header
    %s11 = sphi 0, %s15
    %p12 = scmp.ge.s32.totalorder %s11, 6
    %s21 = sphi 0, %s23
    %s24 = sphi 0, %s21
    %s25 = sphi 0, %s24
    %s41 = sphi 0, %s25
    %s45 = sphi 0, %s45
    %s47 = sphi 0, %s45
    %s48 = sphi 0, %s47
    %s62 = sphi 0, %s48
    %s66 = sphi 0, %s66
    %s68 = sphi 0, %s66
    %s69 = sphi 0, %s68
    %s83 = sphi 0, %s69
    %s87 = sphi 0, %s87
    %s89 = sphi 0, %s87
    %s90 = sphi 0, %s89
    %s104 = sphi 0, %s90
    %s108 = sphi 0, %s108
    %s110 = sphi 0, %s108
    %s111 = sphi 0, %s110
    %s125 = sphi 0, %s111
    %s131 = sphi 0, %s133
    %s134 = sphi 0, %s131
    %s135 = sphi 0, %s134
    %s151 = sphi 0, %s135
  $region4: #{tpu_custom_call.1} parent=0 // loop_header_branch
    %14 = sbr.rel (%p12) target = $region8
  $region5: #{tpu_custom_call.1} parent=0 // loop_body
    %s16 = ssub.s32 %s11, 1
    %s17 = ssub.s32 %s11, 2
    %s18 = sadd.s32 %s11, 1
    %s19 = ssub.s32 %s11, %s18
    %p20 = scmp.eq.s32.totalorder %s19, 0
    %s22 = sadd.s32 %s21, 1
    %s23 = scalar_select %p20, %s21, %s22
    %p26 = pneg %p20
    %p27 = scmp.eq.s32.totalorder %s11, 3
    %p28 = por %p26, %p27
    %p29 = scmp.ne.s32.totalorder %s21, %s24
    %p30 = scmp.eq.s32.totalorder %s11, 0
    %p31 = por %p29, %p30
    %p32 = scmp.ne.s32.totalorder %s21, %s24
    %p33 = scmp.eq.s32.totalorder %s16, 3
    %p34 = por %p32, %p33
    %p35 = scmp.ne.s32.totalorder %s24, %s25
    %p36 = scmp.eq.s32.totalorder %s16, 0
    %p37 = por %p35, %p36
    %p38 = scmp.ne.s32.totalorder %s24, %s25
    %p39 = scmp.eq.s32.totalorder %s17, 3
    %p40 = por %p38, %p39
    %p42 = scmp.ne.s32.totalorder %s25, %s41
    %p43 = scmp.eq.s32.totalorder %s17, 0
    %p44 = por %p42, %p43
    %s46 = sadd.s32 %s45, 1
    %p49 = scmp.eq.s32.totalorder %s11, 3
    %p50 = scmp.ne.s32.totalorder %s45, %s47
    %p51 = scmp.eq.s32.totalorder %s11, 0
    %p52 = por %p50, %p51
    %p53 = scmp.ne.s32.totalorder %s45, %s47
    %p54 = scmp.eq.s32.totalorder %s16, 3
    %p55 = por %p53, %p54
    %p56 = scmp.ne.s32.totalorder %s47, %s48
    %p57 = scmp.eq.s32.totalorder %s16, 0
    %p58 = por %p56, %p57
    %p59 = scmp.ne.s32.totalorder %s47, %s48
    %p60 = scmp.eq.s32.totalorder %s17, 3
    %p61 = por %p59, %p60
    %p63 = scmp.ne.s32.totalorder %s48, %s62
    %p64 = scmp.eq.s32.totalorder %s17, 0
    %p65 = por %p63, %p64
    %s67 = sadd.s32 %s66, 1
    %p70 = scmp.eq.s32.totalorder %s11, 3
    %p71 = scmp.ne.s32.totalorder %s66, %s68
    %p72 = scmp.eq.s32.totalorder %s11, 0
    %p73 = por %p71, %p72
    %p74 = scmp.ne.s32.totalorder %s66, %s68
    %p75 = scmp.eq.s32.totalorder %s16, 3
    %p76 = por %p74, %p75
    %p77 = scmp.ne.s32.totalorder %s68, %s69
    %p78 = scmp.eq.s32.totalorder %s16, 0
    %p79 = por %p77, %p78
    %p80 = scmp.ne.s32.totalorder %s68, %s69
    %p81 = scmp.eq.s32.totalorder %s17, 3
    %p82 = por %p80, %p81
    %p84 = scmp.ne.s32.totalorder %s69, %s83
    %p85 = scmp.eq.s32.totalorder %s17, 0
    %p86 = por %p84, %p85
    %s88 = sadd.s32 %s87, 1
    %p91 = scmp.eq.s32.totalorder %s11, 3
    %p92 = scmp.ne.s32.totalorder %s87, %s89
    %p93 = scmp.eq.s32.totalorder %s11, 0
    %p94 = por %p92, %p93
    %p95 = scmp.ne.s32.totalorder %s87, %s89
    %p96 = scmp.eq.s32.totalorder %s16, 3
    %p97 = por %p95, %p96
    %p98 = scmp.ne.s32.totalorder %s89, %s90
    %p99 = scmp.eq.s32.totalorder %s16, 0
    %p100 = por %p98, %p99
    %p101 = scmp.ne.s32.totalorder %s89, %s90
    %p102 = scmp.eq.s32.totalorder %s17, 3
    %p103 = por %p101, %p102
    %p105 = scmp.ne.s32.totalorder %s90, %s104
    %p106 = scmp.eq.s32.totalorder %s17, 0
    %p107 = por %p105, %p106
    %s109 = sadd.s32 %s108, 1
    %p112 = scmp.eq.s32.totalorder %s11, 3
    %p113 = scmp.ne.s32.totalorder %s108, %s110
    %p114 = scmp.eq.s32.totalorder %s11, 0
    %p115 = por %p113, %p114
    %p116 = scmp.ne.s32.totalorder %s108, %s110
    %p117 = scmp.eq.s32.totalorder %s16, 3
    %p118 = por %p116, %p117
    %p119 = scmp.ne.s32.totalorder %s110, %s111
    %p120 = scmp.eq.s32.totalorder %s16, 0
    %p121 = por %p119, %p120
    %p122 = scmp.ne.s32.totalorder %s110, %s111
    %p123 = scmp.eq.s32.totalorder %s17, 3
    %p124 = por %p122, %p123
    %p126 = scmp.ne.s32.totalorder %s111, %s125
    %p127 = scmp.eq.s32.totalorder %s17, 0
    %p128 = por %p126, %p127
    %s129 = ssub.s32 %s11, %s18
    %p130 = scmp.eq.s32.totalorder %s129, 0
    %s132 = sadd.s32 %s131, 1
    %s133 = scalar_select %p130, %s131, %s132
    %p136 = pneg %p130
    %p137 = scmp.eq.s32.totalorder %s11, 3
    %p138 = por %p136, %p137
    %p139 = scmp.ne.s32.totalorder %s131, %s134
    %p140 = scmp.eq.s32.totalorder %s11, 0
    %p141 = por %p139, %p140
    %p142 = scmp.ne.s32.totalorder %s131, %s134
    %p143 = scmp.eq.s32.totalorder %s16, 3
    %p144 = por %p142, %p143
    %p145 = scmp.ne.s32.totalorder %s134, %s135
    %p146 = scmp.eq.s32.totalorder %s16, 0
    %p147 = por %p145, %p146
    %p148 = scmp.ne.s32.totalorder %s134, %s135
    %p149 = scmp.eq.s32.totalorder %s17, 3
    %p150 = por %p148, %p149
    %p152 = scmp.ne.s32.totalorder %s135, %s151
    %p153 = scmp.eq.s32.totalorder %s17, 0
    %p154 = por %p152, %p153
    %p155 = scmp.le.s32.totalorder 1, %s11
    %p156 = scmp.lt.s32.totalorder %s11, 5
    %p157 = pnand %p155, %p156
    %p158 = pneg %p157
    // Predicated region
    $region9: #{tpu_custom_call.1} parent=5 // pred_check
      _
    $region10: #{tpu_custom_call.1} parent=5 // pred_check_branch
      %160 = sbr.rel (%p157) target = $region12
    $region11: #{tpu_custom_call.1} parent=5 // pred_region
      %s161 = ssub.s32 %s11, 1
      // Predicated region
      $region13: #{tpu_custom_call.1} parent=11 // pred_check
        %p162 = pneg %p58
      $region14: #{tpu_custom_call.1} parent=11 // pred_check_branch
        %164 = sbr.rel (%p162) target = $region16
      $region15: #{tpu_custom_call.1} parent=11 // pred_region
        _
      $region16: #{tpu_custom_call.1} parent=11 // pred_fallthru
        _
      // Predicated region
      $region17: #{tpu_custom_call.1} parent=11 // pred_check
        %p165 = pneg %p79
      $region18: #{tpu_custom_call.1} parent=11 // pred_check_branch
        %167 = sbr.rel (%p165) target = $region20
      $region19: #{tpu_custom_call.1} parent=11 // pred_region
        _
      $region20: #{tpu_custom_call.1} parent=11 // pred_fallthru
        _
      // Predicated region
      $region21: #{tpu_custom_call.1} parent=11 // pred_check
        %p168 = pneg %p100
      $region22: #{tpu_custom_call.1} parent=11 // pred_check_branch
        %170 = sbr.rel (%p168) target = $region24
      $region23: #{tpu_custom_call.1} parent=11 // pred_region
        _
      $region24: #{tpu_custom_call.1} parent=11 // pred_fallthru
        _
      // Predicated region
      $region25: #{tpu_custom_call.1} parent=11 // pred_check
        %p171 = pneg %p121
      $region26: #{tpu_custom_call.1} parent=11 // pred_check_branch
        %173 = sbr.rel (%p171) target = $region28
      $region27: #{tpu_custom_call.1} parent=11 // pred_region
        _
      $region28: #{tpu_custom_call.1} parent=11 // pred_fallthru
        _
    $region12: #{tpu_custom_call.1} parent=5 // pred_fallthru
      _
    %p174 = scmp.lt.s32.totalorder %s11, 4
    // Predicated region
    $region29: #{tpu_custom_call.1} parent=5 // pred_check
      %p175 = pneg %p174
    $region30: #{tpu_custom_call.1} parent=5 // pred_check_branch
      %177 = sbr.rel (%p175) target = $region32
    $region31: #{tpu_custom_call.1} parent=5 // pred_region
      // Predicated region
      $region33: #{tpu_custom_call.1} parent=31 // pred_check
        %p178 = pneg %p31
      $region34: #{tpu_custom_call.1} parent=31 // pred_check_branch
        %180 = sbr.rel (%p178) target = $region36
      $region35: #{tpu_custom_call.1} parent=31 // pred_region
        %s181 = smul.u32 2, %s11
        %p182 = scmp.lt.s32.totalorder %s181, 7
        %s183 = scalar_select %p182, %s181, 7
        %s184 = smul.addr %s183, 8
        %s185 = scalar_lea.vmem %s0, %s184
        %s186 = smul.u32 2, %s11
      $region36: #{tpu_custom_call.1} parent=31 // pred_fallthru
        _
    $region32: #{tpu_custom_call.1} parent=5 // pred_fallthru
      _
    %p187 = scmp.le.s32.totalorder 1, %s11
    %p188 = scmp.lt.s32.totalorder %s11, 5
    %p189 = pnand %p187, %p188
    %p190 = pneg %p189
    // Predicated region
    $region37: #{tpu_custom_call.1} parent=5 // pred_check
      _
    $region38: #{tpu_custom_call.1} parent=5 // pred_check_branch
      %192 = sbr.rel (%p189) target = $region40
    $region39: #{tpu_custom_call.1} parent=5 // pred_region
      %s193 = ssub.s32 %s11, 1
      %s194 = smul.u32 2, %s16
      %p195 = scmp.lt.s32.totalorder %s194, 7
      %s196 = scalar_select %p195, %s194, 7
      %s197 = smul.addr %s196, 8
      %s198 = scalar_lea.vmem %s0, %s197
      %p199 = pneg %p37
      %p200 = pneg %p34
      %p201 = pneg %p58
      %p202 = pneg %p55
      %p203 = pneg %p79
      %p204 = pneg %p76
      %p205 = pneg %p100
      %p206 = pneg %p97
      %p207 = pneg %p121
      %p208 = pneg %p118
      %p209 = pneg %p147
      %p210 = pneg %p144
      %s211 = smul.u32 2, %s16
      %p212 = scmp.lt.s32.totalorder %s211, 7
      %s213 = scalar_select %p212, %s211, 7
      %s214 = smul.addr %s213, 8
      %s215 = scalar_lea.vmem %s5, %s214
      %s216 = smul.u32 2, %s16
      %p217 = scmp.lt.s32.totalorder %s216, 7
      %s218 = scalar_select %p217, %s216, 7
      %s219 = smul.addr %s218, 8
      %s220 = scalar_lea.vmem %s0, %s219
      %s221 = smul.u32 2, %s16
      %s222 = smul.u32 2, %s16
      %p223 = scmp.lt.s32.totalorder %s222, 7
      %s224 = scalar_select %p223, %s222, 7
      %s225 = smul.addr %s224, 8
      %s226 = scalar_lea.vmem %s5, %s225
      %s227 = smul.u32 2, %s16
      %v228 = vld [vmem:[%s220] sm:$0xff]
      %v229 = vld [vmem:[%s220 + $0x8] sm:$0xff]
      %v230 = vld [vmem:[%s1] sm:$0xff]
      %v231 = vld [vmem:[%s1 + $0x8] sm:$0xff]
      %v232 = vld [vmem:[%s1 + $0x10] sm:$0xff]
      %v233 = vld [vmem:[%s1 + $0x18] sm:$0xff]
      %v234 = vld [vmem:[%s1 + $0x20] sm:$0xff]
      %v235 = vld [vmem:[%s1 + $0x28] sm:$0xff]
      %v236 = vld [vmem:[%s1 + $0x30] sm:$0xff]
      %v237 = vld [vmem:[%s1 + $0x38] sm:$0xff]
      %v238 = vld [vmem:[%s1 + $0x40] sm:$0xff]
      %v239 = vld [vmem:[%s1 + $0x48] sm:$0xff]
      %v240 = vld [vmem:[%s1 + $0x50] sm:$0xff]
      %v241 = vld [vmem:[%s1 + $0x58] sm:$0xff]
      %v242 = vld [vmem:[%s1 + $0x60] sm:$0xff]
      %v243 = vld [vmem:[%s1 + $0x68] sm:$0xff]
      %v244 = vld [vmem:[%s1 + $0x70] sm:$0xff]
      %v245 = vld [vmem:[%s1 + $0x78] sm:$0xff]
      %v246 = vld [vmem:[%s2] sm:$0x1]
      %v248 = vlaneseq
      %v249 = vshrl.u32 %v248, 7
      %v250 = vsub.s32 0, %v249
      %v251 = vrot.slane %v246, %v250
      %253 = vmatprep.subr.mxu0 0.0
      %254 = vmatpush1.msra.mxu0 %v245
      %255 = vmatprep.subr.mxu0 0.0
      %256 = vmatpush1.msra.mxu0 %v244
      %257 = vmatprep.subr.mxu0 0.0
      %258 = vmatpush1.msra.mxu0 %v243
      %259 = vmatprep.subr.mxu0 0.0
      %260 = vmatpush1.msra.mxu0 %v242
      %261 = vmatprep.subr.mxu0 0.0
      %262 = vmatpush1.msra.mxu0 %v241
      %263 = vmatprep.subr.mxu0 0.0
      %264 = vmatpush1.msra.mxu0 %v240
      %265 = vmatprep.subr.mxu0 0.0
      %266 = vmatpush1.msra.mxu0 %v239
      %267 = vmatprep.subr.mxu0 0.0
      %268 = vmatpush1.msra.mxu0 %v238
      %269 = vmatprep.subr.mxu0 0.0
      %270 = vmatpush1.msra.mxu0 %v237
      %271 = vmatprep.subr.mxu0 0.0
      %272 = vmatpush1.msra.mxu0 %v236
      %273 = vmatprep.subr.mxu0 0.0
      %274 = vmatpush1.msra.mxu0 %v235
      %275 = vmatprep.subr.mxu0 0.0
      %276 = vmatpush1.msra.mxu0 %v234
      %277 = vmatprep.subr.mxu0 0.0
      %278 = vmatpush1.msra.mxu0 %v233
      %279 = vmatprep.subr.mxu0 0.0
      %280 = vmatpush1.msra.mxu0 %v232
      %281 = vmatprep.subr.mxu0 0.0
      %282 = vmatpush1.msra.mxu0 %v231
      %283 = vmatprep.subr.mxu0 0.0
      %284 = vmatpush1.msra.mxu0 %v230
      %285 = vmatprep.subr.mxu0 0.0
      %286 = vmatpush2.msra.mxu0 0.0
      %287 = vmatprep.subr.mxu0 0.0
      %288 = vmatpush2.msra.mxu0 0.0
      %289 = vmatprep.subr.mxu0 0.0
      %290 = vmatpush2.msra.mxu0 0.0
      %291 = vmatprep.subr.mxu0 0.0
      %292 = vmatpush2.msra.mxu0 0.0
      %293 = vmatprep.subr.mxu0 0.0
      %294 = vmatpush2.msra.mxu0 0.0
      %295 = vmatprep.subr.mxu0 0.0
      %296 = vmatpush2.msra.mxu0 0.0
      %297 = vmatprep.subr.mxu0 0.0
      %298 = vmatpush2.msra.mxu0 0.0
      %299 = vmatprep.subr.mxu0 0.0
      %300 = vmatpush2.msra.mxu0 0.0
      %301 = vmatprep.subr.mxu0 0.0
      %302 = vmatpush2.msra.mxu0 0.0
      %303 = vmatprep.subr.mxu0 0.0
      %304 = vmatpush2.msra.mxu0 0.0
      %305 = vmatprep.subr.mxu0 0.0
      %306 = vmatpush2.msra.mxu0 0.0
      %307 = vmatprep.subr.mxu0 0.0
      %308 = vmatpush2.msra.mxu0 0.0
      %309 = vmatprep.subr.mxu0 0.0
      %310 = vmatpush2.msra.mxu0 0.0
      %311 = vmatprep.subr.mxu0 0.0
      %312 = vmatpush2.msra.mxu0 0.0
      %313 = vmatprep.subr.mxu0 0.0
      %314 = vmatpush2.msra.mxu0 0.0
      %315 = vmatprep.subr.mxu0 0.0
      %316 = vmatpush2.msra.mxu0 0.0
      %317 = vmatprep.mubr.f32.mxu0 0.0
      %318 = vmatmul.mubr.f32.gmra.mxu0 %v228
      %v319 = vpop.f32.mrf.mxu0
      %v320 = vadd.f32 %v251, %v319
      %v321 = vpop.f32.mrf.mxu0
      %322 = vmatprep.mubr.f32.mxu0 0.0
      %323 = vmatmul.mubr.f32.gmra.mxu0 %v229
      %v324 = vpop.f32.mrf.mxu0
      %v325 = vadd.f32 %v251, %v324
      %v326 = vpop.f32.mrf.mxu0
      %327 = vdwg.mxu0
      %v328 = vmax.f32 %v320, 0.0
      %v329 = vmax.f32 %v325, 0.0
      %v330 = vld [vmem:[%s3] sm:$0xff]
      %v331 = vld [vmem:[%s3 + $0x8] sm:$0xff]
      %v332 = vld [vmem:[%s3 + $0x10] sm:$0xff]
      %v333 = vld [vmem:[%s3 + $0x18] sm:$0xff]
      %v334 = vld [vmem:[%s3 + $0x20] sm:$0xff]
      %v335 = vld [vmem:[%s3 + $0x28] sm:$0xff]
      %v336 = vld [vmem:[%s3 + $0x30] sm:$0xff]
      %v337 = vld [vmem:[%s3 + $0x38] sm:$0xff]
      %v338 = vld [vmem:[%s3 + $0x40] sm:$0xff]
      %v339 = vld [vmem:[%s3 + $0x48] sm:$0xff]
      %v340 = vld [vmem:[%s3 + $0x50] sm:$0xf]
      %v341 = vld [vmem:[%s4] sm:$0x1]
      %v343 = vlaneseq
      %v344 = vshrl.u32 %v343, 7
      %v345 = vsub.s32 0, %v344
      %v346 = vrot.slane %v341, %v345
      %vm348 = vcmask 687104
      %v350 = vsel %vm348, %v328, 0
      %v353 = vsel %vm348, %v329, 0
      %vm355 = vcmask 1043456
      %v357 = vsel %vm355, %v340, 0
      %359 = vmatprep.subr.mxu0 0.0
      %360 = vmatpush1.msra.mxu0 0.0
      %361 = vmatprep.subr.mxu0 0.0
      %362 = vmatpush1.msra.mxu0 0.0
      %363 = vmatprep.subr.mxu0 0.0
      %364 = vmatpush1.msra.mxu0 0.0
      %365 = vmatprep.subr.mxu0 0.0
      %366 = vmatpush1.msra.mxu0 0.0
      %367 = vmatprep.subr.mxu0 0.0
      %368 = vmatpush1.msra.mxu0 0.0
      %369 = vmatprep.subr.mxu0 0.0
      %370 = vmatpush1.msra.mxu0 %v357
      %371 = vmatprep.subr.mxu0 0.0
      %372 = vmatpush1.msra.mxu0 %v339
      %373 = vmatprep.subr.mxu0 0.0
      %374 = vmatpush1.msra.mxu0 %v338
      %375 = vmatprep.subr.mxu0 0.0
      %376 = vmatpush1.msra.mxu0 %v337
      %377 = vmatprep.subr.mxu0 0.0
      %378 = vmatpush1.msra.mxu0 %v336
      %379 = vmatprep.subr.mxu0 0.0
      %380 = vmatpush1.msra.mxu0 %v335
      %381 = vmatprep.subr.mxu0 0.0
      %382 = vmatpush1.msra.mxu0 %v334
      %383 = vmatprep.subr.mxu0 0.0
      %384 = vmatpush1.msra.mxu0 %v333
      %385 = vmatprep.subr.mxu0 0.0
      %386 = vmatpush1.msra.mxu0 %v332
      %387 = vmatprep.subr.mxu0 0.0
      %388 = vmatpush1.msra.mxu0 %v331
      %389 = vmatprep.subr.mxu0 0.0
      %390 = vmatpush1.msra.mxu0 %v330
      %391 = vmatprep.subr.mxu0 0.0
      %392 = vmatpush2.msra.mxu0 0.0
      %393 = vmatprep.subr.mxu0 0.0
      %394 = vmatpush2.msra.mxu0 0.0
      %395 = vmatprep.subr.mxu0 0.0
      %396 = vmatpush2.msra.mxu0 0.0
      %397 = vmatprep.subr.mxu0 0.0
      %398 = vmatpush2.msra.mxu0 0.0
      %399 = vmatprep.subr.mxu0 0.0
      %400 = vmatpush2.msra.mxu0 0.0
      %401 = vmatprep.subr.mxu0 0.0
      %402 = vmatpush2.msra.mxu0 0.0
      %403 = vmatprep.subr.mxu0 0.0
      %404 = vmatpush2.msra.mxu0 0.0
      %405 = vmatprep.subr.mxu0 0.0
      %406 = vmatpush2.msra.mxu0 0.0
      %407 = vmatprep.subr.mxu0 0.0
      %408 = vmatpush2.msra.mxu0 0.0
      %409 = vmatprep.subr.mxu0 0.0
      %410 = vmatpush2.msra.mxu0 0.0
      %411 = vmatprep.subr.mxu0 0.0
      %412 = vmatpush2.msra.mxu0 0.0
      %413 = vmatprep.subr.mxu0 0.0
      %414 = vmatpush2.msra.mxu0 0.0
      %415 = vmatprep.subr.mxu0 0.0
      %416 = vmatpush2.msra.mxu0 0.0
      %417 = vmatprep.subr.mxu0 0.0
      %418 = vmatpush2.msra.mxu0 0.0
      %419 = vmatprep.subr.mxu0 0.0
      %420 = vmatpush2.msra.mxu0 0.0
      %421 = vmatprep.subr.mxu0 0.0
      %422 = vmatpush2.msra.mxu0 0.0
      %423 = vmatprep.mubr.f32.mxu0 0.0
      %424 = vmatmul.mubr.f32.gmra.mxu0 %v350
      %v425 = vpop.f32.mrf.mxu0
      %v426 = vadd.f32 %v346, %v425
      %v427 = vpop.f32.mrf.mxu0
      %428 = vmatprep.mubr.f32.mxu0 0.0
      %429 = vmatmul.mubr.f32.gmra.mxu0 %v353
      %v430 = vpop.f32.mrf.mxu0
      %v431 = vadd.f32 %v346, %v430
      %v432 = vpop.f32.mrf.mxu0
      %433 = vdwg.mxu0
      %vm434 = vcmask 80896
      %435 = vst.msk [vmem:[%s226] sm:$0xff] %vm434, %v426
      %436 = vst.msk [vmem:[%s226 + $0x8] sm:$0xff] %vm434, %v431
      %s437 = smul.u32 2, %s16
      %p438 = scmp.lt.s32.totalorder %s437, 7
      %s439 = scalar_select %p438, %s437, 7
      %s440 = smul.addr %s439, 8
      %s441 = scalar_lea.vmem %s5, %s440
      // Predicated region
      $region41: #{tpu_custom_call.1} parent=39 // pred_check
        %p442 = pneg %p144
      $region42: #{tpu_custom_call.1} parent=39 // pred_check_branch
        %444 = sbr.rel (%p442) target = $region44
      $region43: #{tpu_custom_call.1} parent=39 // pred_region
        %s445 = smul.u32 2, %s16
      $region44: #{tpu_custom_call.1} parent=39 // pred_fallthru
        _
    $region40: #{tpu_custom_call.1} parent=5 // pred_fallthru
      _
    %p446 = scmp.le.s32.totalorder 2, %s11
    // Predicated region
    $region45: #{tpu_custom_call.1} parent=5 // pred_check
      %p447 = pneg %p446
    $region46: #{tpu_custom_call.1} parent=5 // pred_check_branch
      %449 = sbr.rel (%p447) target = $region48
    $region47: #{tpu_custom_call.1} parent=5 // pred_region
      %s450 = ssub.s32 %s11, 2
      // Predicated region
      $region49: #{tpu_custom_call.1} parent=47 // pred_check
        %p451 = pneg %p150
      $region50: #{tpu_custom_call.1} parent=47 // pred_check_branch
        %453 = sbr.rel (%p451) target = $region52
      $region51: #{tpu_custom_call.1} parent=47 // pred_region
        %s454 = smul.u32 2, %s17
        %p455 = scmp.lt.s32.totalorder %s454, 7
        %s456 = scalar_select %p455, %s454, 7
        %s457 = smul.addr %s456, 8
        %s458 = scalar_lea.vmem %s5, %s457
      $region52: #{tpu_custom_call.1} parent=47 // pred_fallthru
        _
    $region48: #{tpu_custom_call.1} parent=5 // pred_fallthru
      _
  $region6: #{tpu_custom_call.1} parent=0 // loop_footer
    %s15 = sadd.s32 1, %s11
  $region7: #{tpu_custom_call.1} parent=0 // loop_footer_branch
    %10 = sbr.rel target = $region3
  $region8: #{tpu_custom_call.1} parent=0 // loop_exit
    _

</llo_original>
